<compile_context>
chip_gen: v7x
topology: tpu7x:2x2x1
jax: 0.10.0
libtpu: 0.0.40
codegen_flags: <defaults>
</compile_context>

<pallas_src>
import jax
import jax.numpy as jnp
from jax.experimental import pallas as pl
from jax.experimental.pallas import tpu as pltpu

LANE = 128  # TPU lane width


def _round_up(n, m):
    return ((n + m - 1) // m) * m


def _contextnet_kernel(x_ref, w1_ref, b1_ref, w2_ref, b2_ref, w3_ref, b3_ref, o_ref):
    # Three MXU matmuls (bf16 in, f32 accumulate) + f32 bias/ReLU epilogues on the VPU.
    x = x_ref[...].astype(jnp.bfloat16)

    h1 = jnp.dot(x, w1_ref[...], preferred_element_type=jnp.float32) + b1_ref[...]
    h1 = jnp.maximum(h1, 0.0)

    h2 = jnp.dot(h1.astype(jnp.bfloat16), w2_ref[...],
                 preferred_element_type=jnp.float32) + b2_ref[...]
    h2 = jnp.maximum(h2, 0.0)

    out = jnp.dot(h2.astype(jnp.bfloat16), w3_ref[...],
                  preferred_element_type=jnp.float32) + b3_ref[...]
    o_ref[...] = out.astype(o_ref.dtype)


def init_contextnet_params(key, input_dim, output_dim, hidden_dim=64):
    """Deterministic init mirroring nn.Linear fan-in init; stored as (in, out)."""
    ks = jax.random.split(key, 6)

    def lin(kw, kb, fan_in, fan_out):
        bound = 1.0 / jnp.sqrt(fan_in)
        w = jax.random.uniform(kw, (fan_in, fan_out), jnp.float32, -bound, bound)
        b = jax.random.uniform(kb, (1, fan_out), jnp.float32, -bound, bound)
        return w, b

    w1, b1 = lin(ks[0], ks[1], input_dim, hidden_dim)
    w2, b2 = lin(ks[2], ks[3], hidden_dim, hidden_dim)
    w3, b3 = lin(ks[4], ks[5], hidden_dim, output_dim)
    return {"w1": w1, "b1": b1, "w2": w2, "b2": b2, "w3": w3, "b3": b3}


def prepare_params(params):
    """Pad hidden/output feature dims up to the 128-lane width and cast weights to bf16.

    Zero padding is inert: padded hidden columns stay exactly 0 through bias+ReLU and
    contribute nothing to the next matmul; padded output columns are sliced off.
    """
    w1, b1 = params["w1"], params["b1"]
    w2, b2 = params["w2"], params["b2"]
    w3, b3 = params["w3"], params["b3"]
    in_dim, hidden = w1.shape
    out_dim = w3.shape[1]
    hp = _round_up(hidden, LANE)
    op = _round_up(out_dim, LANE)

    def pad2(a, rows, cols):
        return jnp.pad(a, ((0, rows - a.shape[0]), (0, cols - a.shape[1])))

    return {
        "w1": pad2(w1, in_dim, hp).astype(jnp.bfloat16),
        "b1": pad2(b1, 1, hp).astype(jnp.float32),
        "w2": pad2(w2, hp, hp).astype(jnp.bfloat16),
        "b2": pad2(b2, 1, hp).astype(jnp.float32),
        "w3": pad2(w3, hp, op).astype(jnp.bfloat16),
        "b3": pad2(b3, 1, op).astype(jnp.float32),
        "out_dim": out_dim,  # plain python int (kept static)
    }


def contextnet_forward(x, prepared, tb=256):
    """x: (B, input_dim) float32. prepared: output of prepare_params."""
    B, in_dim = x.shape
    out_dim = prepared["out_dim"]
    w1, b1 = prepared["w1"], prepared["b1"]
    w2, b2 = prepared["w2"], prepared["b2"]
    w3, b3 = prepared["w3"], prepared["b3"]
    hp = w1.shape[1]
    op = w3.shape[1]

    # Batch tile: fill the MXU M-dim when B is large, but never exceed B (rounded to
    # the 8-row sublane granule). Pad the batch so the grid divides exactly.
    tb = max(8, min(tb, _round_up(B, 8)))
    bp = _round_up(B, tb)
    if bp != B:
        x = jnp.pad(x, ((0, bp - B), (0, 0)))
    grid = (bp // tb,)

    flops = 2 * bp * (in_dim * hp + hp * hp + hp * op)
    bytes_accessed = (
        bp * in_dim * 4                                   # x (f32)
        + (w1.size + w2.size + w3.size) * 2               # weights (bf16)
        + (b1.size + b2.size + b3.size) * 4               # biases (f32)
        + bp * op * 4                                     # output (f32)
    )

    out = pl.pallas_call(
        _contextnet_kernel,
        out_shape=jax.ShapeDtypeStruct((bp, op), jnp.float32),
        grid_spec=pltpu.PrefetchScalarGridSpec(
            num_scalar_prefetch=0,
            grid=grid,
            in_specs=[
                pl.BlockSpec((tb, in_dim), lambda i: (i, 0)),   # x: row tiles
                pl.BlockSpec(w1.shape, lambda i: (0, 0)),       # weights/biases: resident,
                pl.BlockSpec(b1.shape, lambda i: (0, 0)),       # fetched once (constant
                pl.BlockSpec(w2.shape, lambda i: (0, 0)),       # block index across grid)
                pl.BlockSpec(b2.shape, lambda i: (0, 0)),
                pl.BlockSpec(w3.shape, lambda i: (0, 0)),
                pl.BlockSpec(b3.shape, lambda i: (0, 0)),
            ],
            out_specs=pl.BlockSpec((tb, op), lambda i: (i, 0)),  # lane-dense (op=128k)
        ),
        compiler_params=pltpu.CompilerParams(
            dimension_semantics=("parallel",),
            vmem_limit_bytes=32 * 1024 * 1024,
        ),
        cost_estimate=pl.CostEstimate(
            flops=flops, transcendentals=0, bytes_accessed=bytes_accessed
        ),
    )(x, w1, b1, w2, b2, w3, b3)

    return out[:B, :out_dim]


def contextnet_ref(x, prepared):
    """Pure-JAX reference using the same padded/bf16 params and f32 accumulation."""
    bf = jnp.bfloat16
    h1 = jnp.dot(x.astype(bf), prepared["w1"],
                 preferred_element_type=jnp.float32) + prepared["b1"]
    h1 = jnp.maximum(h1, 0.0)
    h2 = jnp.dot(h1.astype(bf), prepared["w2"],
                 preferred_element_type=jnp.float32) + prepared["b2"]
    h2 = jnp.maximum(h2, 0.0)
    out = jnp.dot(h2.astype(bf), prepared["w3"],
                  preferred_element_type=jnp.float32) + prepared["b3"]
    return out[:, :prepared["out_dim"]]


if __name__ == "__main__":
    key = jax.random.PRNGKey(0)
    k_param, k_x1, k_x2 = jax.random.split(key, 3)

    batch, input_dim, hidden_dim, output_dim = 8, 16, 64, 8
    raw_params = init_contextnet_params(k_param, input_dim, output_dim, hidden_dim)
    prepared = prepare_params(raw_params)

    fwd = jax.jit(lambda xx: contextnet_forward(xx, prepared))

    # Small batch (single grid step).
    x_small = jax.random.normal(k_x1, (batch, input_dim), jnp.float32)
    out_small = jax.block_until_ready(fwd(x_small))
    ref_small = contextnet_ref(x_small, prepared)
    assert out_small.shape == (batch, output_dim)
    assert jnp.allclose(out_small, ref_small, atol=1e-3, rtol=1e-3)

    # Larger, non-multiple batch (exercises tiling, padding and the parallel grid axis).
    big_batch = 300
    x_big = jax.random.normal(k_x2, (big_batch, input_dim), jnp.float32)
    out_big = jax.block_until_ready(fwd(x_big))
    ref_big = contextnet_ref(x_big, prepared)
    assert out_big.shape == (big_batch, output_dim)
    assert jnp.allclose(out_big, ref_big, atol=1e-3, rtol=1e-3)

    print("KERNEL_OK")
</pallas_src>

<mosaic_0001>
module attributes {stable_mosaic.version = 11 : i64} {
  func.func @_contextnet_kernel(%arg0: i32, %arg1: memref<8x16xf32, #tpu.memory_space<vmem>>, %arg2: memref<16x128xbf16, #tpu.memory_space<vmem>>, %arg3: memref<1x128xf32, #tpu.memory_space<vmem>>, %arg4: memref<128x128xbf16, #tpu.memory_space<vmem>>, %arg5: memref<1x128xf32, #tpu.memory_space<vmem>>, %arg6: memref<128x128xbf16, #tpu.memory_space<vmem>>, %arg7: memref<1x128xf32, #tpu.memory_space<vmem>>, %arg8: memref<8x128xf32, #tpu.memory_space<vmem>>) attributes {dimension_semantics = [#tpu.dimension_semantics<parallel>], iteration_bounds = array<i64: 1>, scalar_prefetch = 0 : i64, scratch_operands = 0 : i64, tpu.core_type = #tpu.core_type<tc>, window_params = [{transform_indices = @transform_0, window_bounds = array<i64: 8, 16>}, {pipeline_mode = #tpu.pipeline_mode<synchronous>, transform_indices = @transform_1, window_bounds = array<i64: 16, 128>}, {pipeline_mode = #tpu.pipeline_mode<synchronous>, transform_indices = @transform_2, window_bounds = array<i64: 1, 128>}, {pipeline_mode = #tpu.pipeline_mode<synchronous>, transform_indices = @transform_3, window_bounds = array<i64: 128, 128>}, {pipeline_mode = #tpu.pipeline_mode<synchronous>, transform_indices = @transform_4, window_bounds = array<i64: 1, 128>}, {pipeline_mode = #tpu.pipeline_mode<synchronous>, transform_indices = @transform_5, window_bounds = array<i64: 128, 128>}, {pipeline_mode = #tpu.pipeline_mode<synchronous>, transform_indices = @transform_6, window_bounds = array<i64: 1, 128>}, {transform_indices = @transform_7, window_bounds = array<i64: 8, 128>}]} {
    %c0 = arith.constant 0 : index
    %c0_0 = arith.constant 0 : index
    %0 = vector.load %arg1[%c0, %c0_0] : memref<8x16xf32, #tpu.memory_space<vmem>>, vector<8x16xf32>
    %1 = arith.truncf %0 : vector<8x16xf32> to vector<8x16xbf16>
    %c0_1 = arith.constant 0 : index
    %c0_2 = arith.constant 0 : index
    %2 = vector.load %arg2[%c0_1, %c0_2] : memref<16x128xbf16, #tpu.memory_space<vmem>>, vector<16x128xbf16>
    %cst = arith.constant dense<0.000000e+00> : vector<8x128xf32>
    %3 = tpu.matmul %1, %2, %cst {dimension_numbers = #tpu.dot_dimension_numbers<[1], [0], [0], [1], [0, 0, 1, 1], [], []>} : vector<8x16xbf16>, vector<16x128xbf16>, vector<8x128xf32> -> vector<8x128xf32>
    %c0_3 = arith.constant 0 : index
    %c0_4 = arith.constant 0 : index
    %4 = vector.load %arg3[%c0_3, %c0_4] : memref<1x128xf32, #tpu.memory_space<vmem>>, vector<1x128xf32>
    %5 = vector.broadcast %4 : vector<1x128xf32> to vector<8x128xf32>
    %6 = arith.addf %3, %5 : vector<8x128xf32>
    %cst_5 = arith.constant 0.000000e+00 : f32
    %7 = vector.broadcast %cst_5 : f32 to vector<8x128xf32>
    %8 = arith.maximumf %6, %7 : vector<8x128xf32>
    %9 = arith.truncf %8 : vector<8x128xf32> to vector<8x128xbf16>
    %c0_6 = arith.constant 0 : index
    %c0_7 = arith.constant 0 : index
    %10 = vector.load %arg4[%c0_6, %c0_7] : memref<128x128xbf16, #tpu.memory_space<vmem>>, vector<128x128xbf16>
    %cst_8 = arith.constant dense<0.000000e+00> : vector<8x128xf32>
    %11 = tpu.matmul %9, %10, %cst_8 {dimension_numbers = #tpu.dot_dimension_numbers<[1], [0], [0], [1], [0, 0, 1, 1], [], []>} : vector<8x128xbf16>, vector<128x128xbf16>, vector<8x128xf32> -> vector<8x128xf32>
    %c0_9 = arith.constant 0 : index
    %c0_10 = arith.constant 0 : index
    %12 = vector.load %arg5[%c0_9, %c0_10] : memref<1x128xf32, #tpu.memory_space<vmem>>, vector<1x128xf32>
    %13 = vector.broadcast %12 : vector<1x128xf32> to vector<8x128xf32>
    %14 = arith.addf %11, %13 : vector<8x128xf32>
    %cst_11 = arith.constant 0.000000e+00 : f32
    %15 = vector.broadcast %cst_11 : f32 to vector<8x128xf32>
    %16 = arith.maximumf %14, %15 : vector<8x128xf32>
    %17 = arith.truncf %16 : vector<8x128xf32> to vector<8x128xbf16>
    %c0_12 = arith.constant 0 : index
    %c0_13 = arith.constant 0 : index
    %18 = vector.load %arg6[%c0_12, %c0_13] : memref<128x128xbf16, #tpu.memory_space<vmem>>, vector<128x128xbf16>
    %cst_14 = arith.constant dense<0.000000e+00> : vector<8x128xf32>
    %19 = tpu.matmul %17, %18, %cst_14 {dimension_numbers = #tpu.dot_dimension_numbers<[1], [0], [0], [1], [0, 0, 1, 1], [], []>} : vector<8x128xbf16>, vector<128x128xbf16>, vector<8x128xf32> -> vector<8x128xf32>
    %c0_15 = arith.constant 0 : index
    %c0_16 = arith.constant 0 : index
    %20 = vector.load %arg7[%c0_15, %c0_16] : memref<1x128xf32, #tpu.memory_space<vmem>>, vector<1x128xf32>
    %21 = vector.broadcast %20 : vector<1x128xf32> to vector<8x128xf32>
    %22 = arith.addf %19, %21 : vector<8x128xf32>
    %c0_17 = arith.constant 0 : index
    %c0_18 = arith.constant 0 : index
    %23 = vector.load %arg8[%c0_17, %c0_18] : memref<8x128xf32, #tpu.memory_space<vmem>>, vector<8x128xf32>
    tpu.vector_store %arg8[%c0_17, %c0_18], %22 {strides = array<i32>} : memref<8x128xf32, #tpu.memory_space<vmem>>, vector<8x128xf32>,
    return
  }
  func.func @transform_0(%arg0: i32) -> (i32, i32) {
    %c0_i32 = arith.constant 0 : i32
    %c0_i32_0 = arith.constant 0 : i32
    return %arg0, %c0_i32 : i32, i32
  }
  func.func @transform_1(%arg0: i32) -> (i32, i32) {
    %c0_i32 = arith.constant 0 : i32
    %c0_i32_0 = arith.constant 0 : i32
    %c0_i32_1 = arith.constant 0 : i32
    return %c0_i32, %c0_i32_0 : i32, i32
  }
  func.func @transform_2(%arg0: i32) -> (i32, i32) {
    %c0_i32 = arith.constant 0 : i32
    %c0_i32_0 = arith.constant 0 : i32
    %c0_i32_1 = arith.constant 0 : i32
    return %c0_i32, %c0_i32_0 : i32, i32
  }
  func.func @transform_3(%arg0: i32) -> (i32, i32) {
    %c0_i32 = arith.constant 0 : i32
    %c0_i32_0 = arith.constant 0 : i32
    %c0_i32_1 = arith.constant 0 : i32
    return %c0_i32, %c0_i32_0 : i32, i32
  }
  func.func @transform_4(%arg0: i32) -> (i32, i32) {
    %c0_i32 = arith.constant 0 : i32
    %c0_i32_0 = arith.constant 0 : i32
    %c0_i32_1 = arith.constant 0 : i32
    return %c0_i32, %c0_i32_0 : i32, i32
  }
  func.func @transform_5(%arg0: i32) -> (i32, i32) {
    %c0_i32 = arith.constant 0 : i32
    %c0_i32_0 = arith.constant 0 : i32
    %c0_i32_1 = arith.constant 0 : i32
    return %c0_i32, %c0_i32_0 : i32, i32
  }
  func.func @transform_6(%arg0: i32) -> (i32, i32) {
    %c0_i32 = arith.constant 0 : i32
    %c0_i32_0 = arith.constant 0 : i32
    %c0_i32_1 = arith.constant 0 : i32
    return %c0_i32, %c0_i32_0 : i32, i32
  }
  func.func @transform_7(%arg0: i32) -> (i32, i32) {
    %c0_i32 = arith.constant 0 : i32
    %c0_i32_0 = arith.constant 0 : i32
    return %arg0, %c0_i32 : i32, i32
  }
}

</mosaic_0001>

<llo_original>
// kernel: _lambda_.1
$region0: #{_lambda_.1}
  #allocation0 [shape = 'u32[]', space=smem, size = 0x4, offset = 0x4, fixed_abs, tag = 'smem constant byte address 0x4 - core index']
  #allocation1 [shape = 'u32[144,128]{1,0:T(1,128)}', space=vmem, size = 0x12000, scoped, tag = 'internal scratch']
  %s0 = inlined_call_operand.vmem [shape: f32[8,16], index: 0, kind: input, shape index: {}]
  %s1 = inlined_call_operand.vmem [shape: bf16[16,128], index: 1, kind: input, shape index: {}]
  %s2 = inlined_call_operand.hbm [shape: f32[1,128], index: 2, kind: input, shape index: {}]
  %s3 = inlined_call_operand.hbm [shape: bf16[128,128], index: 3, kind: input, shape index: {}]
  %s4 = inlined_call_operand.vmem [shape: f32[1,128], index: 4, kind: input, shape index: {}]
  %s5 = inlined_call_operand.hbm [shape: bf16[128,128], index: 5, kind: input, shape index: {}]
  %s6 = inlined_call_operand.vmem [shape: f32[1,128], index: 6, kind: input, shape index: {}]
  %s7 = inlined_call_operand.hbm [shape: f32[8,128], index: 7, kind: output, shape index: {}]
  %s8 = sld [smem:[#allocation0]]
  $region50: #{_lambda_.1} parent=0
    _
  %s10 = ssub.s32 1, %s8
  %s11 = scalar_select 0, %s10, %s8
  $region1: #{_lambda_.1} parent=0
    #allocation2 [shape = 'u8[512]{0}', space=vmem, size = 0x400, scoped, tag = 'input window, operand 2, single buffered']
    #allocation3 [shape = 's32[1]{0}', space=sflag, size = 0x4, scoped, tag = 'scoped memory for _lambda_.1']
    #allocation4 [shape = 's32[1]{0}', space=sflag, size = 0x4, scoped, tag = 'scoped memory for _lambda_.1']
    #allocation5 [shape = 'u8[32768]{0}', space=vmem, size = 0x8000, scoped, tag = 'input window, operand 3, single buffered']
    #allocation6 [shape = 's32[1]{0}', space=sflag, size = 0x4, scoped, tag = 'scoped memory for _lambda_.1']
    #allocation7 [shape = 'u8[32768]{0}', space=vmem, size = 0x8000, scoped, tag = 'input window, operand 5, single buffered']
    #allocation8 [shape = 'u8[4096]{0}', space=vmem, size = 0x1000, scoped, tag = 'output window, operand 0, single buffered']
    %12 = vsyncpa [#allocation3], 0
    %13 = vsyncpa [#allocation6], 0
    %14 = vsyncpa [#allocation4], 0
    // Predicated region
    $region2: #{_lambda_.1} parent=1 // pred_check
      _
    $region3: #{_lambda_.1} parent=1 // pred_check_branch
      %16 = sbr.rel (0) target = $region5
    $region4: #{_lambda_.1} parent=1 // pred_region
      _
    $region5: #{_lambda_.1} parent=1 // pred_fallthru
      _
    // Predicated region
    $region6: #{_lambda_.1} parent=1 // pred_check
      _
    $region7: #{_lambda_.1} parent=1 // pred_check_branch
      %18 = sbr.rel (0) target = $region9
    $region8: #{_lambda_.1} parent=1 // pred_region
      _
    $region9: #{_lambda_.1} parent=1 // pred_fallthru
      _
    // Predicated region
    $region10: #{_lambda_.1} parent=1 // pred_check
      _
    $region11: #{_lambda_.1} parent=1 // pred_check_branch
      %20 = sbr.rel (0) target = $region13
    $region12: #{_lambda_.1} parent=1 // pred_region
      %s22 = ssub.s32 16, 16
      %23 = vsyncadd [#allocation3], %s22
      %s25 = sshll.u32 [#allocation2], 4
      %s26 = int_to_ptr.vmem [resolvable:$true] %s25
      %28 = dma.hbm_to_vmem [thread:$0]  %s2, 16, %s26, [#allocation3]
    $region13: #{_lambda_.1} parent=1 // pred_fallthru
      _
    // Predicated region
    $region14: #{_lambda_.1} parent=1 // pred_check
      _
    $region15: #{_lambda_.1} parent=1 // pred_check_branch
      %30 = sbr.rel (0) target = $region17
    $region16: #{_lambda_.1} parent=1 // pred_region
      %s32 = ssub.s32 1024, 1024
      %33 = vsyncadd [#allocation6], %s32
      %s34 = sshll.u32 [#allocation5], 4
      %s35 = int_to_ptr.vmem [resolvable:$true] %s34
      %40 = dma.hbm_to_vmem [thread:$0]  %s3, 1024, %s35, [#allocation6], 64, 64, 4
    $region17: #{_lambda_.1} parent=1 // pred_fallthru
      _
    // Predicated region
    $region18: #{_lambda_.1} parent=1 // pred_check
      _
    $region19: #{_lambda_.1} parent=1 // pred_check_branch
      %42 = sbr.rel (0) target = $region21
    $region20: #{_lambda_.1} parent=1 // pred_region
      _
    $region21: #{_lambda_.1} parent=1 // pred_fallthru
      _
    // Predicated region
    $region22: #{_lambda_.1} parent=1 // pred_check
      _
    $region23: #{_lambda_.1} parent=1 // pred_check_branch
      %44 = sbr.rel (0) target = $region25
    $region24: #{_lambda_.1} parent=1 // pred_region
      %s46 = ssub.s32 1024, 1024
      %47 = vsyncadd [#allocation6], %s46
      %s48 = sshll.u32 [#allocation7], 4
      %s49 = int_to_ptr.vmem [resolvable:$true] %s48
      %54 = dma.hbm_to_vmem [thread:$0]  %s5, 1024, %s49, [#allocation6], 64, 64, 4
    $region25: #{_lambda_.1} parent=1 // pred_fallthru
      _
    // Predicated region
    $region26: #{_lambda_.1} parent=1 // pred_check
      _
    $region27: #{_lambda_.1} parent=1 // pred_check_branch
      %56 = sbr.rel (0) target = $region29
    $region28: #{_lambda_.1} parent=1 // pred_region
      _
    $region29: #{_lambda_.1} parent=1 // pred_fallthru
      _
    // Predicated region
    $region30: #{_lambda_.1} parent=1 // pred_check
      _
    $region31: #{_lambda_.1} parent=1 // pred_check_branch
      %58 = sbr.rel (0) target = $region33
    $region32: #{_lambda_.1} parent=1 // pred_region
      %59 = dma.done [#allocation3], 16
    $region33: #{_lambda_.1} parent=1 // pred_fallthru
      _
    // Predicated region
    $region34: #{_lambda_.1} parent=1 // pred_check
      _
    $region35: #{_lambda_.1} parent=1 // pred_check_branch
      %61 = sbr.rel (0) target = $region37
    $region36: #{_lambda_.1} parent=1 // pred_region
      %62 = dma.done [#allocation6], 1024
    $region37: #{_lambda_.1} parent=1 // pred_fallthru
      _
    // Predicated region
    $region38: #{_lambda_.1} parent=1 // pred_check
      _
    $region39: #{_lambda_.1} parent=1 // pred_check_branch
      %64 = sbr.rel (0) target = $region41
    $region40: #{_lambda_.1} parent=1 // pred_region
      %65 = dma.done [#allocation6], 1024
    $region41: #{_lambda_.1} parent=1 // pred_fallthru
      _
    %v67 = vld [vmem:[%s0] sm:$0xff]
    %v68 = vpack.c.bf16 %v67, %v67
    %v69 = vld [vmem:[%s1] sm:$0xf]
    %v70 = vld [vmem:[%s1 + $0x4] sm:$0xf]
    %v71 = vld [vmem:[#allocation2] sm:$0x1]
    %v73 = vlaneseq
    %v74 = vshrl.u32 %v73, 7
    %v75 = vsub.s32 0, %v74
    %v76 = vrot.slane %v71, %v75
    %v80 = vunpack.c.l.b16 %v69
    %v81 = vunpack.c.l.b16 %v70
    %v82 = vpack.c.b16 %v81, %v80
    %vm84 = vcmask 130048
    %v86 = vsel %vm84, %v68, 0
    %88 = vmatprep.subr.bf16.mxu0 0
    %89 = vmatpush1.bf16.msra.mxu0 %v82
    %90 = vmatprep.subr.bf16.mxu0 0
    %91 = vmatpush1.bf16.msra.mxu0 0
    %92 = vmatprep.subr.bf16.mxu0 0
    %93 = vmatpush1.bf16.msra.mxu0 0
    %94 = vmatprep.subr.bf16.mxu0 0
    %95 = vmatpush1.bf16.msra.mxu0 0
    %96 = vmatprep.subr.bf16.mxu0 0
    %97 = vmatpush1.bf16.msra.mxu0 0
    %98 = vmatprep.subr.bf16.mxu0 0
    %99 = vmatpush1.bf16.msra.mxu0 0
    %100 = vmatprep.subr.bf16.mxu0 0
    %101 = vmatpush1.bf16.msra.mxu0 0
    %102 = vmatprep.subr.bf16.mxu0 0
    %103 = vmatpush1.bf16.msra.mxu0 0
    %104 = vmatprep.subr.bf16.mxu0 0
    %105 = vmatpush1.bf16.msra.mxu0 0
    %106 = vmatprep.subr.bf16.mxu0 0
    %107 = vmatpush1.bf16.msra.mxu0 0
    %108 = vmatprep.subr.bf16.mxu0 0
    %109 = vmatpush1.bf16.msra.mxu0 0
    %110 = vmatprep.subr.bf16.mxu0 0
    %111 = vmatpush1.bf16.msra.mxu0 0
    %112 = vmatprep.subr.bf16.mxu0 0
    %113 = vmatpush1.bf16.msra.mxu0 0
    %114 = vmatprep.subr.bf16.mxu0 0
    %115 = vmatpush1.bf16.msra.mxu0 0
    %116 = vmatprep.subr.bf16.mxu0 0
    %117 = vmatpush1.bf16.msra.mxu0 0
    %118 = vmatprep.subr.bf16.mxu0 0
    %119 = vmatpush1.bf16.msra.mxu0 0
    %120 = vmatprep.mubr.bf16.mxu0 0
    %121 = vmatmul.mubr.bf16.gmra.mrb[0].mxu0 %v86
    %v122 = vpop.f32.mrb[0].mxu0
    %v123 = vadd.f32 %v76, %v122
    %v124 = vpop.f32.mrb[0].mxu0
    %v125 = vpop.f32.mrb[0].mxu0
    %v126 = vpop.f32.mrb[0].mxu0
    %127 = vdwg.mxu0
    %v128 = vmax.f32 %v123, 0.0
    %v129 = vpack.c.bf16 %v128, %v128
    %v130 = vld [vmem:[#allocation5] sm:$0xf]
    %v131 = vld [vmem:[#allocation5 + $0x4] sm:$0xf]
    %v132 = vld [vmem:[#allocation5 + $0x8] sm:$0xf]
    %v133 = vld [vmem:[#allocation5 + $0xc] sm:$0xf]
    %v134 = vld [vmem:[#allocation5 + $0x10] sm:$0xf]
    %v135 = vld [vmem:[#allocation5 + $0x14] sm:$0xf]
    %v136 = vld [vmem:[#allocation5 + $0x18] sm:$0xf]
    %v137 = vld [vmem:[#allocation5 + $0x1c] sm:$0xf]
    %v138 = vld [vmem:[#allocation5 + $0x20] sm:$0xf]
    %v139 = vld [vmem:[#allocation5 + $0x24] sm:$0xf]
    %v140 = vld [vmem:[#allocation5 + $0x28] sm:$0xf]
    %v141 = vld [vmem:[#allocation5 + $0x2c] sm:$0xf]
    %v142 = vld [vmem:[#allocation5 + $0x30] sm:$0xf]
    %v143 = vld [vmem:[#allocation5 + $0x34] sm:$0xf]
    %v144 = vld [vmem:[#allocation5 + $0x38] sm:$0xf]
    %v145 = vld [vmem:[#allocation5 + $0x3c] sm:$0xf]
    %v146 = vld [vmem:[%s4] sm:$0x1]
    %v148 = vlaneseq
    %v149 = vshrl.u32 %v148, 7
    %v150 = vsub.s32 0, %v149
    %v151 = vrot.slane %v146, %v150
    %v169 = vunpack.c.l.b16 %v130
    %v170 = vunpack.c.l.b16 %v131
    %v171 = vunpack.c.l.b16 %v132
    %v172 = vunpack.c.l.b16 %v133
    %v173 = vunpack.c.l.b16 %v134
    %v174 = vunpack.c.l.b16 %v135
    %v175 = vunpack.c.l.b16 %v136
    %v176 = vunpack.c.l.b16 %v137
    %v177 = vunpack.c.l.b16 %v138
    %v178 = vunpack.c.l.b16 %v139
    %v179 = vunpack.c.l.b16 %v140
    %v180 = vunpack.c.l.b16 %v141
    %v181 = vunpack.c.l.b16 %v142
    %v182 = vunpack.c.l.b16 %v143
    %v183 = vunpack.c.l.b16 %v144
    %v184 = vunpack.c.l.b16 %v145
    %v185 = vpack.c.b16 %v170, %v169
    %v186 = vpack.c.b16 %v172, %v171
    %v187 = vpack.c.b16 %v174, %v173
    %v188 = vpack.c.b16 %v176, %v175
    %v189 = vpack.c.b16 %v178, %v177
    %v190 = vpack.c.b16 %v180, %v179
    %v191 = vpack.c.b16 %v182, %v181
    %v192 = vpack.c.b16 %v184, %v183
    %201 = vmatprep.subr.bf16.mxu0 0
    %202 = vmatpush1.bf16.msra.mxu0 %v185
    %203 = vmatprep.subr.bf16.mxu0 0
    %204 = vmatpush1.bf16.msra.mxu0 %v186
    %205 = vmatprep.subr.bf16.mxu0 0
    %206 = vmatpush1.bf16.msra.mxu0 %v187
    %207 = vmatprep.subr.bf16.mxu0 0
    %208 = vmatpush1.bf16.msra.mxu0 %v188
    %209 = vmatprep.subr.bf16.mxu0 0
    %210 = vmatpush1.bf16.msra.mxu0 %v189
    %211 = vmatprep.subr.bf16.mxu0 0
    %212 = vmatpush1.bf16.msra.mxu0 %v190
    %213 = vmatprep.subr.bf16.mxu0 0
    %214 = vmatpush1.bf16.msra.mxu0 %v191
    %215 = vmatprep.subr.bf16.mxu0 0
    %216 = vmatpush1.bf16.msra.mxu0 %v192
    %217 = vmatprep.subr.bf16.mxu0 0
    %218 = vmatpush1.bf16.msra.mxu0 0
    %219 = vmatprep.subr.bf16.mxu0 0
    %220 = vmatpush1.bf16.msra.mxu0 0
    %221 = vmatprep.subr.bf16.mxu0 0
    %222 = vmatpush1.bf16.msra.mxu0 0
    %223 = vmatprep.subr.bf16.mxu0 0
    %224 = vmatpush1.bf16.msra.mxu0 0
    %225 = vmatprep.subr.bf16.mxu0 0
    %226 = vmatpush1.bf16.msra.mxu0 0
    %227 = vmatprep.subr.bf16.mxu0 0
    %228 = vmatpush1.bf16.msra.mxu0 0
    %229 = vmatprep.subr.bf16.mxu0 0
    %230 = vmatpush1.bf16.msra.mxu0 0
    %231 = vmatprep.subr.bf16.mxu0 0
    %232 = vmatpush1.bf16.msra.mxu0 0
    %233 = vmatprep.mubr.bf16.mxu0 0
    %234 = vmatmul.mubr.bf16.gmra.mrb[0].mxu0 %v129
    %v235 = vpop.f32.mrb[0].mxu0
    %v236 = vadd.f32 %v151, %v235
    %v237 = vpop.f32.mrb[0].mxu0
    %v238 = vpop.f32.mrb[0].mxu0
    %v239 = vpop.f32.mrb[0].mxu0
    %240 = vdwg.mxu0
    %v241 = vmax.f32 %v236, 0.0
    %v242 = vpack.c.bf16 %v241, %v241
    %v243 = vld [vmem:[#allocation7] sm:$0xf]
    %v244 = vld [vmem:[#allocation7 + $0x4] sm:$0xf]
    %v245 = vld [vmem:[#allocation7 + $0x8] sm:$0xf]
    %v246 = vld [vmem:[#allocation7 + $0xc] sm:$0xf]
    %v247 = vld [vmem:[#allocation7 + $0x10] sm:$0xf]
    %v248 = vld [vmem:[#allocation7 + $0x14] sm:$0xf]
    %v249 = vld [vmem:[#allocation7 + $0x18] sm:$0xf]
    %v250 = vld [vmem:[#allocation7 + $0x1c] sm:$0xf]
    %v251 = vld [vmem:[#allocation7 + $0x20] sm:$0xf]
    %v252 = vld [vmem:[#allocation7 + $0x24] sm:$0xf]
    %v253 = vld [vmem:[#allocation7 + $0x28] sm:$0xf]
    %v254 = vld [vmem:[#allocation7 + $0x2c] sm:$0xf]
    %v255 = vld [vmem:[#allocation7 + $0x30] sm:$0xf]
    %v256 = vld [vmem:[#allocation7 + $0x34] sm:$0xf]
    %v257 = vld [vmem:[#allocation7 + $0x38] sm:$0xf]
    %v258 = vld [vmem:[#allocation7 + $0x3c] sm:$0xf]
    %v259 = vld [vmem:[%s6] sm:$0x1]
    %v261 = vlaneseq
    %v262 = vshrl.u32 %v261, 7
    %v263 = vsub.s32 0, %v262
    %v264 = vrot.slane %v259, %v263
    %v282 = vunpack.c.l.b16 %v243
    %v283 = vunpack.c.l.b16 %v244
    %v284 = vunpack.c.l.b16 %v245
    %v285 = vunpack.c.l.b16 %v246
    %v286 = vunpack.c.l.b16 %v247
    %v287 = vunpack.c.l.b16 %v248
    %v288 = vunpack.c.l.b16 %v249
    %v289 = vunpack.c.l.b16 %v250
    %v290 = vunpack.c.l.b16 %v251
    %v291 = vunpack.c.l.b16 %v252
    %v292 = vunpack.c.l.b16 %v253
    %v293 = vunpack.c.l.b16 %v254
    %v294 = vunpack.c.l.b16 %v255
    %v295 = vunpack.c.l.b16 %v256
    %v296 = vunpack.c.l.b16 %v257
    %v297 = vunpack.c.l.b16 %v258
    %v298 = vpack.c.b16 %v283, %v282
    %v299 = vpack.c.b16 %v285, %v284
    %v300 = vpack.c.b16 %v287, %v286
    %v301 = vpack.c.b16 %v289, %v288
    %v302 = vpack.c.b16 %v291, %v290
    %v303 = vpack.c.b16 %v293, %v292
    %v304 = vpack.c.b16 %v295, %v294
    %v305 = vpack.c.b16 %v297, %v296
    %314 = vmatprep.subr.bf16.mxu0 0
    %315 = vmatpush1.bf16.msra.mxu0 %v298
    %316 = vmatprep.subr.bf16.mxu0 0
    %317 = vmatpush1.bf16.msra.mxu0 %v299
    %318 = vmatprep.subr.bf16.mxu0 0
    %319 = vmatpush1.bf16.msra.mxu0 %v300
    %320 = vmatprep.subr.bf16.mxu0 0
    %321 = vmatpush1.bf16.msra.mxu0 %v301
    %322 = vmatprep.subr.bf16.mxu0 0
    %323 = vmatpush1.bf16.msra.mxu0 %v302
    %324 = vmatprep.subr.bf16.mxu0 0
    %325 = vmatpush1.bf16.msra.mxu0 %v303
    %326 = vmatprep.subr.bf16.mxu0 0
    %327 = vmatpush1.bf16.msra.mxu0 %v304
    %328 = vmatprep.subr.bf16.mxu0 0
    %329 = vmatpush1.bf16.msra.mxu0 %v305
    %330 = vmatprep.subr.bf16.mxu0 0
    %331 = vmatpush1.bf16.msra.mxu0 0
    %332 = vmatprep.subr.bf16.mxu0 0
    %333 = vmatpush1.bf16.msra.mxu0 0
    %334 = vmatprep.subr.bf16.mxu0 0
    %335 = vmatpush1.bf16.msra.mxu0 0
    %336 = vmatprep.subr.bf16.mxu0 0
    %337 = vmatpush1.bf16.msra.mxu0 0
    %338 = vmatprep.subr.bf16.mxu0 0
    %339 = vmatpush1.bf16.msra.mxu0 0
    %340 = vmatprep.subr.bf16.mxu0 0
    %341 = vmatpush1.bf16.msra.mxu0 0
    %342 = vmatprep.subr.bf16.mxu0 0
    %343 = vmatpush1.bf16.msra.mxu0 0
    %344 = vmatprep.subr.bf16.mxu0 0
    %345 = vmatpush1.bf16.msra.mxu0 0
    %346 = vmatprep.mubr.bf16.mxu0 0
    %347 = vmatmul.mubr.bf16.gmra.mrb[0].mxu0 %v242
    %v348 = vpop.f32.mrb[0].mxu0
    %v349 = vadd.f32 %v264, %v348
    %v350 = vpop.f32.mrb[0].mxu0
    %v351 = vpop.f32.mrb[0].mxu0
    %v352 = vpop.f32.mrb[0].mxu0
    %353 = vdwg.mxu0
    %354 = vst [vmem:[#allocation8] sm:$0xff] %v349
    // Predicated region
    $region42: #{_lambda_.1} parent=1 // pred_check
      _
    $region43: #{_lambda_.1} parent=1 // pred_check_branch
      %356 = sbr.rel (0) target = $region45
    $region44: #{_lambda_.1} parent=1 // pred_region
      %s358 = ssub.s32 128, 128
      %359 = vsyncadd [#allocation4], %s358
      %s361 = sshll.u32 [#allocation8], 4
      %s362 = int_to_ptr.vmem [resolvable:$true] %s361
      %364 = dma.vmem_to_hbm [thread:$0]  %s362, 128, %s7, [#allocation4]
    $region45: #{_lambda_.1} parent=1 // pred_fallthru
      _
    // Predicated region
    $region46: #{_lambda_.1} parent=1 // pred_check
      _
    $region47: #{_lambda_.1} parent=1 // pred_check_branch
      %366 = sbr.rel (0) target = $region49
    $region48: #{_lambda_.1} parent=1 // pred_region
      %367 = dma.done [#allocation4], 128
    $region49: #{_lambda_.1} parent=1 // pred_fallthru
      _
    %368 = vsyncpa [#allocation3], 1
    %369 = vsyncpa [#allocation6], 1
    %370 = vsyncpa [#allocation4], 1

</llo_original>
